<compile_context>
chip_gen: v6e
topology: v6e:2x2x1
jax: 0.10.0
libtpu: 0.0.40
codegen_flags: <defaults>
</compile_context>

<pallas_src>
import math
from typing import NamedTuple

import jax
import jax.numpy as jnp
from jax import lax
from jax.experimental import pallas as pl
from jax.experimental.pallas import tpu as pltpu


def _round_up(x: int, m: int) -> int:
    return ((x + m - 1) // m) * m


def _cdiv(x: int, m: int) -> int:
    return (x + m - 1) // m


# ----------------------------------------------------------------------------- kernel
def _fcn_kernel(x_ref, w1_ref, w2_ref, o_ref, acc_ref):
    """One (core, batch-tile, hidden-tile) grid step.

    x_ref  : (TB, IN)        input rows (IN = full in_features, unpadded)
    w1_ref : (IN, TH)        W1^T block (hidden in the lane dim)
    w2_ref : (OUT, TH)       W2  block  (hidden in the lane dim)
    o_ref  : (1, TB, OUT)    per-core partial-output tile (written once, last j)
    acc_ref: (TB, OUT) f32   VMEM accumulator over hidden tiles
    """
    j = pl.program_id(2)

    @pl.when(j == 0)
    def _init():
        acc_ref[...] = jnp.zeros_like(acc_ref)

    # Narrow (e.g. bf16) weights are streamed from HBM and upcast in-register;
    # with f32 weights these casts are no-ops.
    x = x_ref[...].astype(jnp.float32)
    w1 = w1_ref[...].astype(jnp.float32)
    w2 = w2_ref[...].astype(jnp.float32)

    # hidden block = relu(x @ W1^T)  -- W1 is pre-transposed, so a plain dot.
    h = jnp.maximum(jnp.dot(x, w1, preferred_element_type=jnp.float32), 0.0)

    # partial output = h @ W2^T: contract the lane (hidden) dim of both operands.
    acc_ref[...] += lax.dot_general(
        h, w2,
        dimension_numbers=(((1,), (1,)), ((), ())),
        preferred_element_type=jnp.float32,
    )

    @pl.when(j == pl.num_programs(2) - 1)
    def _finalize():
        o_ref[0] = acc_ref[...].astype(o_ref.dtype)


# ----------------------------------------------------------------------------- prep
class PreparedFCN(NamedTuple):
    w1t: jax.Array       # (in_f, hidden_pp)  = W1.T, hidden zero-padded to nc*jc*th
    w2: jax.Array        # (out_f, hidden_pp) = W2,   hidden zero-padded identically
    hidden_tile: int     # th (multiple of 128)
    num_cores: int       # nc in {1, 2}: hidden reduction split for dual-TC chips
    tiles_per_core: int  # jc; nc * jc * th == hidden_pp


def prepare_params(w1, w2, *, hidden_tile: int = 4096,
                   split_hidden_across_cores: bool = True,
                   weights_dtype=None) -> PreparedFCN:
    """One-time weight layout prep (do at parameter-init time, NOT per call).

    w1: (hidden, in_features)  -- nn.Linear(in, hidden, bias=False).weight
    w2: (out_features, hidden) -- nn.Linear(hidden, out, bias=False).weight

    Zero-padding the hidden dim is semantics-preserving: padded W1^T columns give
    relu(0) = 0 hidden activations, which the padded W2 columns multiply to 0.
    """
    hidden, _in_f = w1.shape
    out_f, hidden2 = w2.shape
    assert hidden2 == hidden

    hidden_p = _round_up(hidden, 128)
    n_raw = max(1, _cdiv(hidden_p, hidden_tile))
    nc = 2 if (split_hidden_across_cores and n_raw >= 2) else 1
    n_tiles = _round_up(n_raw, nc)
    th = _round_up(_cdiv(hidden_p, n_tiles), 128)       # tight, 128-aligned tiles
    hidden_pp = n_tiles * th

    w1t = jnp.pad(w1.T, ((0, 0), (0, hidden_pp - hidden)))
    w2p = jnp.pad(w2, ((0, 0), (0, hidden_pp - hidden)))
    if weights_dtype is not None:
        w1t = w1t.astype(weights_dtype)
        w2p = w2p.astype(weights_dtype)
    return PreparedFCN(w1t, w2p, th, nc, n_tiles // nc)


# ----------------------------------------------------------------------------- forward
def fcn_forward(x, params: PreparedFCN, *, batch_tile: int = 512):
    """x: (B, in_features) -> (B, out_features)."""
    w1t, w2p, th, nc, jc = params
    in_f, hidden_pp = w1t.shape
    out_f = w2p.shape[0]
    B = x.shape[0]
    assert x.shape[1] == in_f

    # Batch tiling: nb == 1 for typical B (weights streamed once); cap tb so the
    # (tb, th) f32 hidden intermediate stays modest; no mostly-empty last tile.
    h_budget_bytes = 12 * 1024 * 1024
    tb_cap = max(8, ((h_budget_bytes // (th * 4)) // 8) * 8)
    bt = max(8, min(batch_tile, tb_cap))
    nb = _cdiv(B, bt)
    tb = _round_up(_cdiv(B, nb), 8)
    b_p = nb * tb
    xp = x if b_p == B else jnp.pad(x, ((0, b_p - B), (0, 0)))

    grid = (nc, nb, jc)

    w_isz = jnp.dtype(w1t.dtype).itemsize
    x_isz = jnp.dtype(x.dtype).itemsize

    # Honest traffic estimate: weights are re-streamed once per batch tile, x once
    # per core; output partials are (nc, b_p, out_f) f32.
    flops = 2 * b_p * hidden_pp * (in_f + out_f)
    bytes_accessed = (nb * (w1t.size + w2p.size) * w_isz
                      + nc * xp.size * x_isz
                      + nc * b_p * out_f * 4)

    # Double-buffered tiles + f32 hidden intermediate + accumulator, with headroom.
    tile_bytes = (2 * ((in_f + out_f) * th * w_isz + tb * in_f * x_isz + tb * out_f * 4)
                  + tb * th * 4 + tb * out_f * 4)
    vmem_limit = int(min(max(2 * tile_bytes, 32 * 1024 * 1024), 64 * 1024 * 1024))

    partials = pl.pallas_call(
        _fcn_kernel,
        out_shape=jax.ShapeDtypeStruct((nc, b_p, out_f), jnp.float32),
        grid_spec=pltpu.PrefetchScalarGridSpec(
            num_scalar_prefetch=0,
            grid=grid,
            in_specs=[
                pl.BlockSpec((tb, in_f), lambda c, i, j: (i, 0)),
                pl.BlockSpec((in_f, th), lambda c, i, j, jc=jc: (0, c * jc + j)),
                pl.BlockSpec((out_f, th), lambda c, i, j, jc=jc: (0, c * jc + j)),
            ],
            out_specs=pl.BlockSpec((1, tb, out_f), lambda c, i, j: (c, i, 0)),
            scratch_shapes=[pltpu.VMEM((tb, out_f), jnp.float32)],
        ),
        compiler_params=pltpu.CompilerParams(
            dimension_semantics=("parallel", "parallel", "arbitrary"),
            vmem_limit_bytes=vmem_limit,
        ),
        cost_estimate=pl.CostEstimate(
            flops=int(flops), transcendentals=0, bytes_accessed=int(bytes_accessed)),
    )(xp, w1t, w2p)

    # Combine per-core partial hidden reductions, drop batch padding.
    y = jnp.sum(partials, axis=0)
    return y[:B].astype(x.dtype)


def param_matched_fcn(x, w1, w2, *, hidden_tile: int = 4096, batch_tile: int = 512,
                      weights_dtype=None):
    """Convenience wrapper matching the PyTorch module's forward.

    In production, call prepare_params() once and reuse it across forward calls;
    this wrapper re-prepares per call for convenience only.
    """
    params = prepare_params(w1, w2, hidden_tile=hidden_tile,
                            weights_dtype=weights_dtype)
    return fcn_forward(x, params, batch_tile=batch_tile)


# ----------------------------------------------------------------------------- helpers
def init_params(key, in_features, out_features, d, dtype=jnp.float32):
    """Deterministic parameter init mirroring the module's __init__ shapes."""
    hidden = max(1, math.floor(d / (in_features + out_features)))
    k1, k2 = jax.random.split(key)
    b1 = 1.0 / math.sqrt(in_features)
    b2 = 1.0 / math.sqrt(hidden)
    w1 = jax.random.uniform(k1, (hidden, in_features), dtype, minval=-b1, maxval=b1)
    w2 = jax.random.uniform(k2, (out_features, hidden), dtype, minval=-b2, maxval=b2)
    return w1, w2


def _reference(x, w1, w2):
    h = jnp.maximum(jnp.dot(x, w1.T, precision=lax.Precision.HIGHEST), 0.0)
    return jnp.dot(h, w2.T, precision=lax.Precision.HIGHEST)


if __name__ == "__main__":
    key = jax.random.PRNGKey(0)
    kx1, kp1, kx2, kp2, kx3, kp3 = jax.random.split(key, 6)

    # 1) Small: in=16, out=8, d=768 -> hidden = floor(768/24) = 32.
    #    Single hidden tile, single core, batch=8.
    in_f, out_f = 16, 8
    x1 = jax.random.normal(kx1, (8, in_f), jnp.float32)
    w1a, w2a = init_params(kp1, in_f, out_f, 768)
    p1 = prepare_params(w1a, w2a)
    y1 = jax.block_until_ready(fcn_forward(x1, p1))
    y1_ref = _reference(x1, w1a, w2a)
    assert y1.shape == (8, out_f)
    assert jnp.allclose(y1, y1_ref, atol=1e-3, rtol=1e-3)

    # 2) d=16384 -> hidden = 682 (one tight 768-wide tile), batch=300 (one 304-row
    #    batch tile; weights streamed exactly once).
    x2 = jax.random.normal(kx2, (300, in_f), jnp.float32)
    w1b, w2b = init_params(kp2, in_f, out_f, 16384)
    p2 = prepare_params(w1b, w2b)
    y2 = jax.block_until_ready(fcn_forward(x2, p2))
    y2_ref = _reference(x2, w1b, w2b)
    assert y2.shape == (300, out_f)
    assert jnp.allclose(y2, y2_ref, atol=1e-3, rtol=1e-3)

    # 3) d=288000 -> hidden = 12000: exercises the multi-tile hidden accumulation
    #    and the 2-way core split (2 cores x 2 tiles of 3072), batch=64.
    x3 = jax.random.normal(kx3, (64, in_f), jnp.float32)
    w1c, w2c = init_params(kp3, in_f, out_f, 288000)
    p3 = prepare_params(w1c, w2c)
    y3 = jax.block_until_ready(fcn_forward(x3, p3))
    y3_ref = _reference(x3, w1c, w2c)
    assert y3.shape == (64, out_f)
    assert jnp.allclose(y3, y3_ref, atol=1e-3, rtol=1e-3)

    print("KERNEL_OK")
</pallas_src>

<mosaic_0001>
module attributes {stable_mosaic.version = 11 : i64} {
  func.func @_fcn_kernel(%arg0: i32, %arg1: i32, %arg2: i32, %arg3: memref<8x16xf32, #tpu.memory_space<vmem>>, %arg4: memref<16x128xf32, #tpu.memory_space<vmem>>, %arg5: memref<8x128xf32, #tpu.memory_space<vmem>>, %arg6: memref<1x8x8xf32, #tpu.memory_space<vmem>>, %arg7: memref<8x8xf32, #tpu.memory_space<vmem>>) attributes {dimension_semantics = [#tpu.dimension_semantics<parallel>, #tpu.dimension_semantics<parallel>, #tpu.dimension_semantics<arbitrary>], iteration_bounds = array<i64: 1, 1, 1>, scalar_prefetch = 0 : i64, scratch_operands = 1 : i64, tpu.core_type = #tpu.core_type<tc>, window_params = [{transform_indices = @transform_0, window_bounds = array<i64: 8, 16>}, {transform_indices = @transform_1, window_bounds = array<i64: 16, 128>}, {transform_indices = @transform_2, window_bounds = array<i64: 8, 128>}, {transform_indices = @transform_3, window_bounds = array<i64: 1, 8, 8>}]} {
    %c0_i32 = arith.constant 0 : i32
    %0 = arith.cmpi eq, %arg2, %c0_i32 : i32
    %1 = arith.extui %0 : i1 to i32
    %c0_i32_0 = arith.constant 0 : i32
    %2 = arith.cmpi ne, %1, %c0_i32_0 : i32
    scf.if %2 {
      %cst_14 = arith.constant 0.000000e+00 : f32
      %16 = vector.broadcast %cst_14 : f32 to vector<8x8xf32>
      %c0_15 = arith.constant 0 : index
      %c0_16 = arith.constant 0 : index
      %17 = vector.load %arg7[%c0_15, %c0_16] : memref<8x8xf32, #tpu.memory_space<vmem>>, vector<8x8xf32>
      tpu.vector_store %arg7[%c0_15, %c0_16], %16 {strides = array<i32>} : memref<8x8xf32, #tpu.memory_space<vmem>>, vector<8x8xf32>,
    } else {
    }
    %c0 = arith.constant 0 : index
    %c0_1 = arith.constant 0 : index
    %3 = vector.load %arg3[%c0, %c0_1] : memref<8x16xf32, #tpu.memory_space<vmem>>, vector<8x16xf32>
    %c0_2 = arith.constant 0 : index
    %c0_3 = arith.constant 0 : index
    %4 = vector.load %arg4[%c0_2, %c0_3] : memref<16x128xf32, #tpu.memory_space<vmem>>, vector<16x128xf32>
    %c0_4 = arith.constant 0 : index
    %c0_5 = arith.constant 0 : index
    %5 = vector.load %arg5[%c0_4, %c0_5] : memref<8x128xf32, #tpu.memory_space<vmem>>, vector<8x128xf32>
    %cst = arith.constant dense<0.000000e+00> : vector<8x128xf32>
    %6 = tpu.matmul %3, %4, %cst {dimension_numbers = #tpu.dot_dimension_numbers<[1], [0], [0], [1], [0, 0, 1, 1], [], []>} : vector<8x16xf32>, vector<16x128xf32>, vector<8x128xf32> -> vector<8x128xf32>
    %cst_6 = arith.constant 0.000000e+00 : f32
    %7 = vector.broadcast %cst_6 : f32 to vector<8x128xf32>
    %8 = arith.maximumf %6, %7 : vector<8x128xf32>
    %c0_7 = arith.constant 0 : index
    %c0_8 = arith.constant 0 : index
    %9 = vector.load %arg7[%c0_7, %c0_8] : memref<8x8xf32, #tpu.memory_space<vmem>>, vector<8x8xf32>
    %cst_9 = arith.constant dense<0.000000e+00> : vector<8x8xf32>
    %10 = tpu.matmul %8, %5, %cst_9 {dimension_numbers = #tpu.dot_dimension_numbers<[1], [1], [0], [0], [0, 0, 1, 0], [], []>} : vector<8x128xf32>, vector<8x128xf32>, vector<8x8xf32> -> vector<8x8xf32>
    %11 = arith.addf %9, %10 : vector<8x8xf32>
    %c0_10 = arith.constant 0 : index
    %c0_11 = arith.constant 0 : index
    %12 = vector.load %arg7[%c0_10, %c0_11] : memref<8x8xf32, #tpu.memory_space<vmem>>, vector<8x8xf32>
    tpu.vector_store %arg7[%c0_10, %c0_11], %11 {strides = array<i32>} : memref<8x8xf32, #tpu.memory_space<vmem>>, vector<8x8xf32>,
    %c0_i32_12 = arith.constant 0 : i32
    %13 = arith.cmpi eq, %arg2, %c0_i32_12 : i32
    %14 = arith.extui %13 : i1 to i32
    %c0_i32_13 = arith.constant 0 : i32
    %15 = arith.cmpi ne, %14, %c0_i32_13 : i32
    scf.if %15 {
      %c0_14 = arith.constant 0 : index
      %c0_15 = arith.constant 0 : index
      %16 = vector.load %arg7[%c0_14, %c0_15] : memref<8x8xf32, #tpu.memory_space<vmem>>, vector<8x8xf32>
      %c0_16 = arith.constant 0 : index
      %c0_17 = arith.constant 0 : index
      %c0_18 = arith.constant 0 : index
      %17 = vector.load %arg6[%c0_16, %c0_17, %c0_18] : memref<1x8x8xf32, #tpu.memory_space<vmem>>, vector<1x8x8xf32>
      %18 = vector.shape_cast %17 : vector<1x8x8xf32> to vector<8x8xf32>
      %19 = vector.shape_cast %16 : vector<8x8xf32> to vector<1x8x8xf32>
      tpu.vector_store %arg6[%c0_16, %c0_17, %c0_18], %19 {strides = array<i32>} : memref<1x8x8xf32, #tpu.memory_space<vmem>>, vector<1x8x8xf32>,
    } else {
    }
    return
  }
  func.func @transform_0(%arg0: i32, %arg1: i32, %arg2: i32) -> (i32, i32) {
    %c0_i32 = arith.constant 0 : i32
    %c0_i32_0 = arith.constant 0 : i32
    return %arg1, %c0_i32 : i32, i32
  }
  func.func @transform_1(%arg0: i32, %arg1: i32, %arg2: i32) -> (i32, i32) {
    %c1_i32 = arith.constant 1 : i32
    %0 = arith.muli %arg0, %c1_i32 : i32
    %1 = arith.addi %0, %arg2 : i32
    %c0_i32 = arith.constant 0 : i32
    %c0_i32_0 = arith.constant 0 : i32
    return %c0_i32, %1 : i32, i32
  }
  func.func @transform_2(%arg0: i32, %arg1: i32, %arg2: i32) -> (i32, i32) {
    %c1_i32 = arith.constant 1 : i32
    %0 = arith.muli %arg0, %c1_i32 : i32
    %1 = arith.addi %0, %arg2 : i32
    %c0_i32 = arith.constant 0 : i32
    %c0_i32_0 = arith.constant 0 : i32
    return %c0_i32, %1 : i32, i32
  }
  func.func @transform_3(%arg0: i32, %arg1: i32, %arg2: i32) -> (i32, i32, i32) {
    %c0_i32 = arith.constant 0 : i32
    %c0_i32_0 = arith.constant 0 : i32
    return %arg0, %arg1, %c0_i32 : i32, i32, i32
  }
}

</mosaic_0001>

<llo_original>
// kernel: tpu_custom_call.1
$region0: #{tpu_custom_call.1}
  #allocation0 [shape = 'u32[]', space=smem, size = 0x4, offset = 0x4, fixed_abs, tag = 'smem constant byte address 0x4 - core index']
  #allocation1 [shape = 'u32[144,128]{1,0:T(1,128)}', space=vmem, size = 0x12000, scoped, tag = 'internal scratch']
  #allocation2 [shape = 'f32[8,8]{1,0:T(8,128)}', space=vmem, size = 0x1000, scoped, tag = 'scratch operand']
  %s0 = inlined_call_operand.hbm [shape: f32[8,16], index: 0, kind: input, shape index: {}]
  %s1 = inlined_call_operand.hbm [shape: f32[16,128], index: 1, kind: input, shape index: {}]
  %s2 = inlined_call_operand.hbm [shape: f32[8,128], index: 2, kind: input, shape index: {}]
  %s3 = inlined_call_operand.hbm [shape: f32[1,8,8], index: 3, kind: output, shape index: {}]
  %s4 = sld [smem:[#allocation0]]
  $region42: #{tpu_custom_call.1} parent=0
    _
  %s6 = ssub.s32 1, %s4
  %s7 = scalar_select 0, %s6, %s4
  $region1: #{tpu_custom_call.1} parent=0
    #allocation3 [shape = 'u8[4096]{0}', space=vmem, size = 0x1000, scoped, tag = 'input window, operand 0, single buffered']
    #allocation4 [shape = 's32[1]{0}', space=sflag, size = 0x4, scoped, tag = 'scoped memory for tpu_custom_call.1']
    #allocation5 [shape = 's32[1]{0}', space=sflag, size = 0x4, scoped, tag = 'scoped memory for tpu_custom_call.1']
    #allocation6 [shape = 'u8[8192]{0}', space=vmem, size = 0x2000, scoped, tag = 'input window, operand 1, single buffered']
    #allocation7 [shape = 's32[1]{0}', space=sflag, size = 0x4, scoped, tag = 'scoped memory for tpu_custom_call.1']
    #allocation8 [shape = 'u8[4096]{0}', space=vmem, size = 0x1000, scoped, tag = 'input window, operand 2, single buffered']
    #allocation9 [shape = 'u8[4096]{0}', space=vmem, size = 0x1000, scoped, tag = 'output window, operand 0, single buffered']
    %8 = vsyncpa [#allocation4], 0
    %9 = vsyncpa [#allocation7], 0
    %10 = vsyncpa [#allocation5], 0
    // Predicated region
    $region2: #{tpu_custom_call.1} parent=1 // pred_check
      _
    $region3: #{tpu_custom_call.1} parent=1 // pred_check_branch
      %12 = sbr.rel (0) target = $region5
    $region4: #{tpu_custom_call.1} parent=1 // pred_region
      %s14 = ssub.s32 128, 128
      %15 = vsyncadd [#allocation4], %s14
      %s17 = sshll.u32 [#allocation3], 4
      %s18 = int_to_ptr.vmem [resolvable:$true] %s17
      %20 = dma.hbm_to_vmem [thread:$0]  %s0, 128, %s18, [#allocation4]
    $region5: #{tpu_custom_call.1} parent=1 // pred_fallthru
      _
    // Predicated region
    $region6: #{tpu_custom_call.1} parent=1 // pred_check
      _
    $region7: #{tpu_custom_call.1} parent=1 // pred_check_branch
      %22 = sbr.rel (0) target = $region9
    $region8: #{tpu_custom_call.1} parent=1 // pred_region
      %s23 = sadd.s32 0, 0
      %s25 = ssub.s32 256, 256
      %26 = vsyncadd [#allocation7], %s25
      %s27 = smul.addr %s23, 128
      %s28 = scalar_lea.hbm %s1, %s27
      %s29 = sshll.u32 [#allocation6], 4
      %s30 = int_to_ptr.vmem [resolvable:$true] %s29
      %35 = dma.hbm_to_vmem [thread:$0]  %s28, 256, %s30, [#allocation7], 128, 128, 8
    $region9: #{tpu_custom_call.1} parent=1 // pred_fallthru
      _
    // Predicated region
    $region10: #{tpu_custom_call.1} parent=1 // pred_check
      _
    $region11: #{tpu_custom_call.1} parent=1 // pred_check_branch
      %37 = sbr.rel (0) target = $region13
    $region12: #{tpu_custom_call.1} parent=1 // pred_region
      %s38 = sadd.s32 0, 0
      %s40 = ssub.s32 128, 128
      %41 = vsyncadd [#allocation7], %s40
      %s42 = smul.addr %s38, 128
      %s43 = scalar_lea.hbm %s2, %s42
      %s45 = sshll.u32 [#allocation8], 4
      %s46 = int_to_ptr.vmem [resolvable:$true] %s45
      %48 = dma.hbm_to_vmem [thread:$0]  %s43, 128, %s46, [#allocation7]
    $region13: #{tpu_custom_call.1} parent=1 // pred_fallthru
      _
    // Predicated region
    $region14: #{tpu_custom_call.1} parent=1 // pred_check
      _
    $region15: #{tpu_custom_call.1} parent=1 // pred_check_branch
      %50 = sbr.rel (0) target = $region17
    $region16: #{tpu_custom_call.1} parent=1 // pred_region
      %51 = dma.done [#allocation4], 128
    $region17: #{tpu_custom_call.1} parent=1 // pred_fallthru
      _
    // Predicated region
    $region18: #{tpu_custom_call.1} parent=1 // pred_check
      _
    $region19: #{tpu_custom_call.1} parent=1 // pred_check_branch
      %53 = sbr.rel (0) target = $region21
    $region20: #{tpu_custom_call.1} parent=1 // pred_region
      %54 = dma.done [#allocation7], 256
    $region21: #{tpu_custom_call.1} parent=1 // pred_fallthru
      _
    // Predicated region
    $region22: #{tpu_custom_call.1} parent=1 // pred_check
      _
    $region23: #{tpu_custom_call.1} parent=1 // pred_check_branch
      %56 = sbr.rel (0) target = $region25
    $region24: #{tpu_custom_call.1} parent=1 // pred_region
      %57 = dma.done [#allocation7], 128
    $region25: #{tpu_custom_call.1} parent=1 // pred_fallthru
      _
    %s58 = sadd.s32 0, 0
    %s59 = sadd.s32 0, 0
    %p60 = scmp.eq.s32.totalorder 0, 0
    // Predicated region
    $region26: #{tpu_custom_call.1} parent=1 // pred_check
      %p61 = pneg %p60
    $region27: #{tpu_custom_call.1} parent=1 // pred_check_branch
      %63 = sbr.rel (%p61) target = $region29
    $region28: #{tpu_custom_call.1} parent=1 // pred_region
      %vm64 = vcmask 64512
      %65 = vst.msk [vmem:[#allocation2] sm:$0xff] %vm64, 0.0
    $region29: #{tpu_custom_call.1} parent=1 // pred_fallthru
      _
    %v66 = vld [vmem:[#allocation3] sm:$0xff]
    %v67 = vld [vmem:[#allocation6] sm:$0xff]
    %v68 = vld [vmem:[#allocation6 + $0x8] sm:$0xff]
    %v69 = vld [vmem:[#allocation8] sm:$0xff]
    %vm70 = vcmask 130048
    %v72 = vsel %vm70, %v66, 0
    %74 = vmatprep.subr.mxu0 0.0
    %75 = vmatpush1.msra.mxu0 0.0
    %76 = vmatprep.subr.mxu0 0.0
    %77 = vmatpush1.msra.mxu0 0.0
    %78 = vmatprep.subr.mxu0 0.0
    %79 = vmatpush1.msra.mxu0 0.0
    %80 = vmatprep.subr.mxu0 0.0
    %81 = vmatpush1.msra.mxu0 0.0
    %82 = vmatprep.subr.mxu0 0.0
    %83 = vmatpush1.msra.mxu0 0.0
    %84 = vmatprep.subr.mxu0 0.0
    %85 = vmatpush1.msra.mxu0 0.0
    %86 = vmatprep.subr.mxu0 0.0
    %87 = vmatpush1.msra.mxu0 0.0
    %88 = vmatprep.subr.mxu0 0.0
    %89 = vmatpush1.msra.mxu0 0.0
    %90 = vmatprep.subr.mxu0 0.0
    %91 = vmatpush1.msra.mxu0 0.0
    %92 = vmatprep.subr.mxu0 0.0
    %93 = vmatpush1.msra.mxu0 0.0
    %94 = vmatprep.subr.mxu0 0.0
    %95 = vmatpush1.msra.mxu0 0.0
    %96 = vmatprep.subr.mxu0 0.0
    %97 = vmatpush1.msra.mxu0 0.0
    %98 = vmatprep.subr.mxu0 0.0
    %99 = vmatpush1.msra.mxu0 0.0
    %100 = vmatprep.subr.mxu0 0.0
    %101 = vmatpush1.msra.mxu0 0.0
    %102 = vmatprep.subr.mxu0 0.0
    %103 = vmatpush1.msra.mxu0 %v68
    %104 = vmatprep.subr.mxu0 0.0
    %105 = vmatpush1.msra.mxu0 %v67
    %106 = vmatprep.subr.mxu0 0.0
    %107 = vmatpush2.msra.mxu0 0.0
    %108 = vmatprep.subr.mxu0 0.0
    %109 = vmatpush2.msra.mxu0 0.0
    %110 = vmatprep.subr.mxu0 0.0
    %111 = vmatpush2.msra.mxu0 0.0
    %112 = vmatprep.subr.mxu0 0.0
    %113 = vmatpush2.msra.mxu0 0.0
    %114 = vmatprep.subr.mxu0 0.0
    %115 = vmatpush2.msra.mxu0 0.0
    %116 = vmatprep.subr.mxu0 0.0
    %117 = vmatpush2.msra.mxu0 0.0
    %118 = vmatprep.subr.mxu0 0.0
    %119 = vmatpush2.msra.mxu0 0.0
    %120 = vmatprep.subr.mxu0 0.0
    %121 = vmatpush2.msra.mxu0 0.0
    %122 = vmatprep.subr.mxu0 0.0
    %123 = vmatpush2.msra.mxu0 0.0
    %124 = vmatprep.subr.mxu0 0.0
    %125 = vmatpush2.msra.mxu0 0.0
    %126 = vmatprep.subr.mxu0 0.0
    %127 = vmatpush2.msra.mxu0 0.0
    %128 = vmatprep.subr.mxu0 0.0
    %129 = vmatpush2.msra.mxu0 0.0
    %130 = vmatprep.subr.mxu0 0.0
    %131 = vmatpush2.msra.mxu0 0.0
    %132 = vmatprep.subr.mxu0 0.0
    %133 = vmatpush2.msra.mxu0 0.0
    %134 = vmatprep.subr.mxu0 0.0
    %135 = vmatpush2.msra.mxu0 0.0
    %136 = vmatprep.subr.mxu0 0.0
    %137 = vmatpush2.msra.mxu0 0.0
    %138 = vmatprep.mubr.f32.mxu0 0.0
    %139 = vmatmul.mubr.f32.gmra.mxu0 %v72
    %v140 = vpop.f32.mrf.mxu0
    %v141 = vadd.f32 0.0, %v140
    %v142 = vpop.f32.mrf.mxu0
    %143 = vdwg.mxu0
    %v144 = vmax.f32 %v141, 0.0
    %v145 = vld [vmem:[#allocation2] sm:$0xff]
    %146 = vmatprep.subr.mxu0 0.0
    %147 = vmatpush1.xpose.msra.mxu0 0.0
    %148 = vmatprep.subr.mxu0 0.0
    %149 = vmatpush1.xpose.msra.mxu0 0.0
    %150 = vmatprep.subr.mxu0 0.0
    %151 = vmatpush1.xpose.msra.mxu0 0.0
    %152 = vmatprep.subr.mxu0 0.0
    %153 = vmatpush1.xpose.msra.mxu0 0.0
    %154 = vmatprep.subr.mxu0 0.0
    %155 = vmatpush1.xpose.msra.mxu0 0.0
    %156 = vmatprep.subr.mxu0 0.0
    %157 = vmatpush1.xpose.msra.mxu0 0.0
    %158 = vmatprep.subr.mxu0 0.0
    %159 = vmatpush1.xpose.msra.mxu0 0.0
    %160 = vmatprep.subr.mxu0 0.0
    %161 = vmatpush1.xpose.msra.mxu0 0.0
    %162 = vmatprep.subr.mxu0 0.0
    %163 = vmatpush1.xpose.msra.mxu0 0.0
    %164 = vmatprep.subr.mxu0 0.0
    %165 = vmatpush1.xpose.msra.mxu0 0.0
    %166 = vmatprep.subr.mxu0 0.0
    %167 = vmatpush1.xpose.msra.mxu0 0.0
    %168 = vmatprep.subr.mxu0 0.0
    %169 = vmatpush1.xpose.msra.mxu0 0.0
    %170 = vmatprep.subr.mxu0 0.0
    %171 = vmatpush1.xpose.msra.mxu0 0.0
    %172 = vmatprep.subr.mxu0 0.0
    %173 = vmatpush1.xpose.msra.mxu0 0.0
    %174 = vmatprep.subr.mxu0 0.0
    %175 = vmatpush1.xpose.msra.mxu0 0.0
    %176 = vmatprep.subr.mxu0 0.0
    %177 = vmatpush1.xpose.msra.mxu0 %v69
    %178 = vmatprep.subr.mxu0 0.0
    %179 = vmatpush2.xpose.msra.mxu0 0.0
    %180 = vmatprep.subr.mxu0 0.0
    %181 = vmatpush2.xpose.msra.mxu0 0.0
    %182 = vmatprep.subr.mxu0 0.0
    %183 = vmatpush2.xpose.msra.mxu0 0.0
    %184 = vmatprep.subr.mxu0 0.0
    %185 = vmatpush2.xpose.msra.mxu0 0.0
    %186 = vmatprep.subr.mxu0 0.0
    %187 = vmatpush2.xpose.msra.mxu0 0.0
    %188 = vmatprep.subr.mxu0 0.0
    %189 = vmatpush2.xpose.msra.mxu0 0.0
    %190 = vmatprep.subr.mxu0 0.0
    %191 = vmatpush2.xpose.msra.mxu0 0.0
    %192 = vmatprep.subr.mxu0 0.0
    %193 = vmatpush2.xpose.msra.mxu0 0.0
    %194 = vmatprep.subr.mxu0 0.0
    %195 = vmatpush2.xpose.msra.mxu0 0.0
    %196 = vmatprep.subr.mxu0 0.0
    %197 = vmatpush2.xpose.msra.mxu0 0.0
    %198 = vmatprep.subr.mxu0 0.0
    %199 = vmatpush2.xpose.msra.mxu0 0.0
    %200 = vmatprep.subr.mxu0 0.0
    %201 = vmatpush2.xpose.msra.mxu0 0.0
    %202 = vmatprep.subr.mxu0 0.0
    %203 = vmatpush2.xpose.msra.mxu0 0.0
    %204 = vmatprep.subr.mxu0 0.0
    %205 = vmatpush2.xpose.msra.mxu0 0.0
    %206 = vmatprep.subr.mxu0 0.0
    %207 = vmatpush2.xpose.msra.mxu0 0.0
    %208 = vmatprep.subr.mxu0 0.0
    %209 = vmatpush2.xpose.msra.mxu0 0.0
    %210 = vmatprep.mubr.f32.mxu0 0.0
    %211 = vmatmul.mubr.f32.gmra.mxu0 %v144
    %v212 = vpop.f32.mrf.mxu0
    %v213 = vadd.f32 0.0, %v212
    %v214 = vpop.f32.mrf.mxu0
    %215 = vdwg.mxu0
    %v216 = vadd.f32 %v145, %v213
    %vm217 = vcmask 64512
    %218 = vst.msk [vmem:[#allocation2] sm:$0xff] %vm217, %v216
    // Predicated region
    $region30: #{tpu_custom_call.1} parent=1 // pred_check
      %p219 = pneg %p60
    $region31: #{tpu_custom_call.1} parent=1 // pred_check_branch
      %221 = sbr.rel (%p219) target = $region33
    $region32: #{tpu_custom_call.1} parent=1 // pred_region
      %v222 = vld [vmem:[#allocation2] sm:$0xff]
      %223 = vst.msk [vmem:[#allocation9] sm:$0xff] %vm217, %v222
    $region33: #{tpu_custom_call.1} parent=1 // pred_fallthru
      _
    // Predicated region
    $region34: #{tpu_custom_call.1} parent=1 // pred_check
      _
    $region35: #{tpu_custom_call.1} parent=1 // pred_check_branch
      %225 = sbr.rel (0) target = $region37
    $region36: #{tpu_custom_call.1} parent=1 // pred_region
      %s227 = ssub.s32 128, 128
      %228 = vsyncadd [#allocation5], %s227
      %s230 = sshll.u32 [#allocation9], 4
      %s231 = int_to_ptr.vmem [resolvable:$true] %s230
      %233 = dma.vmem_to_hbm [thread:$0]  %s231, 128, %s3, [#allocation5]
    $region37: #{tpu_custom_call.1} parent=1 // pred_fallthru
      _
    // Predicated region
    $region38: #{tpu_custom_call.1} parent=1 // pred_check
      _
    $region39: #{tpu_custom_call.1} parent=1 // pred_check_branch
      %235 = sbr.rel (0) target = $region41
    $region40: #{tpu_custom_call.1} parent=1 // pred_region
      %236 = dma.done [#allocation5], 128
    $region41: #{tpu_custom_call.1} parent=1 // pred_fallthru
      _
    %237 = vsyncpa [#allocation4], 1
    %238 = vsyncpa [#allocation7], 1
    %239 = vsyncpa [#allocation5], 1

</llo_original>
